<compile_context>
chip_gen: v7x
topology: tpu7x:2x2x1
jax: 0.10.0
libtpu: 0.0.40
codegen_flags: <defaults>
</compile_context>

<pallas_src>
import functools
import math

import jax
import jax.numpy as jnp
from jax import lax
from jax.experimental import pallas as pl
from jax.experimental.pallas import tpu as pltpu


# ------------------------------- utilities -------------------------------- #

@functools.lru_cache(maxsize=None)
def _vmem_limit_bytes():
    """Scoped-VMEM request derived from the chip (v5e/v6e: 128 MiB phys, v7x: 64)."""
    try:
        cap = pltpu.get_tpu_info().vmem_capacity_bytes
        return int(min(cap * 3 // 4, 96 * 1024 * 1024))
    except Exception:
        return 32 * 1024 * 1024


def _pick_tile(dim, target, multiple):
    """Largest tile <= target that divides `dim` and is a multiple of `multiple`.
    Falls back to the full dimension (always a legal Mosaic block shape)."""
    if dim <= target:
        return dim
    t = (target // multiple) * multiple
    while t >= multiple:
        if dim % t == 0:
            return t
        t -= multiple
    return dim


def _check_vmem(tag, nbytes):
    """Guard against the full-dim fallback of _pick_tile exceeding scoped VMEM."""
    limit = _vmem_limit_bytes()
    if nbytes > limit:
        raise ValueError(
            f"{tag}: estimated VMEM footprint {nbytes / 2**20:.1f} MiB exceeds the "
            f"scoped limit {limit / 2**20:.1f} MiB; reduce tile sizes / dims.")


# ------------------------------ Pallas kernels ----------------------------- #

def group_linear_kernel(x_ref, w_ref, b_ref, o_ref, acc_ref):
    """One head-group output tile of y[g] = x @ W[g] + b[g], accumulated over K.

    x_ref: (tm, tk)   w_ref: (tk, dk)   b_ref: (1, dk)   o_ref/acc_ref: (tm, dk)
    """
    k = pl.program_id(2)

    @pl.when(k == 0)
    def _():
        acc_ref[...] = jnp.zeros_like(acc_ref)

    acc_ref[...] += jnp.dot(x_ref[...], w_ref[...],
                            preferred_element_type=jnp.float32)

    @pl.when(k == pl.num_programs(2) - 1)
    def _():
        o_ref[...] = (acc_ref[...] + b_ref[...].astype(jnp.float32)).astype(o_ref.dtype)


def mha_attention_kernel(q_ref, k_ref, v_ref, o_ref, w_ref, *, approx_recip):
    """One (batch, head, query-tile) grid step.  1/sqrt(dk) is pre-folded into W_q.

    q_ref: (tq, dk)   k_ref/v_ref: (Skv, dk)   o_ref: (tq, dk)   w_ref: (tq, Skv)
    """
    q = q_ref[...]
    k = k_ref[...]
    v = v_ref[...]

    # scores = Q K^T expressed as a contraction on the last dims (no explicit .T).
    s = lax.dot_general(q, k, dimension_numbers=(((1,), (1,)), ((), ())),
                        preferred_element_type=jnp.float32)            # (tq, Skv)

    m = jnp.max(s, axis=-1, keepdims=True)
    e = jnp.exp(s - m)                                                  # f32
    denom = jnp.sum(e, axis=-1, keepdims=True)

    # PV matmul on the unnormalized exp weights; normalize only the (tq, dk) result.
    ctx = lax.dot_general(e.astype(v.dtype), v,
                          dimension_numbers=(((1,), (0,)), ((), ())),
                          preferred_element_type=jnp.float32)           # (tq, dk)

    # approx reciprocal (EUP slot) is plenty for the context on the bf16 path;
    # the emitted weights always use the exact divide.
    r_ctx = pl.reciprocal(denom, approx=True) if approx_recip else 1.0 / denom
    o_ref[...] = (ctx * r_ctx).astype(o_ref.dtype)
    w_ref[...] = (e * (1.0 / denom)).astype(w_ref.dtype)


def out_proj_kernel(ctx_ref, w_ref, b_ref, o_ref, *, num_heads):
    """output tile = concat_h(ctx[h]) @ W_o + b_o  (lane-dense LHS, single MXU dot).

    ctx_ref: (H, tm, dk)   w_ref: (D, tn)   b_ref: (1, tn)   o_ref: (tm, tn)
    """
    x = jnp.concatenate([ctx_ref[h] for h in range(num_heads)], axis=-1)  # (tm, D)
    acc = jnp.dot(x, w_ref[...], preferred_element_type=jnp.float32)
    o_ref[...] = (acc + b_ref[...].astype(jnp.float32)).astype(o_ref.dtype)


# ------------------------------ host wrappers ------------------------------ #

def pallas_group_linear(x2d, w_hb, b_hb, *, tm=256, tk=1024,
                        compute_dtype=jnp.bfloat16, out_dtype=None):
    """y[g] = x2d @ w_hb[g] + b_hb[g] for every head group g.

    x2d: (M, K); w_hb: (G, K, dk); b_hb: (G, 1, dk)  ->  (G, M, dk).
    The head-major output comes directly from the out_spec so downstream kernels
    see dk as a full (legal) minor block dim and no XLA slices are required.
    With tk = K (typical d_model) the x tile stays resident across all groups.
    """
    M, K = x2d.shape
    G, Kw, dk = w_hb.shape
    assert K == Kw
    out_dtype = compute_dtype if out_dtype is None else out_dtype

    x2d = x2d.astype(compute_dtype)
    w_hb = w_hb.astype(compute_dtype)
    b_hb = b_hb.astype(jnp.float32)

    tm = _pick_tile(M, tm, 8)
    tk = _pick_tile(K, tk, 128)
    grid = (M // tm, G, K // tk)

    isz = jnp.dtype(compute_dtype).itemsize
    osz = jnp.dtype(out_dtype).itemsize
    _check_vmem("group_linear",
                2 * (tm * tk + tk * dk) * isz + 2 * tm * dk * osz + tm * dk * 4)

    cost = pl.CostEstimate(
        flops=2 * M * K * G * dk,
        transcendentals=0,
        bytes_accessed=M * K * isz + G * K * dk * isz + G * M * dk * osz)

    return pl.pallas_call(
        group_linear_kernel,
        out_shape=jax.ShapeDtypeStruct((G, M, dk), out_dtype),
        grid=grid,
        in_specs=[
            pl.BlockSpec((tm, tk), lambda i, g, k: (i, k)),
            pl.BlockSpec((None, tk, dk), lambda i, g, k: (g, k, 0)),
            pl.BlockSpec((None, 1, dk), lambda i, g, k: (g, 0, 0)),
        ],
        out_specs=pl.BlockSpec((None, tm, dk), lambda i, g, k: (g, i, 0)),
        scratch_shapes=[pltpu.VMEM((tm, dk), jnp.float32)],
        compiler_params=pltpu.CompilerParams(
            dimension_semantics=("parallel", "parallel", "arbitrary"),
            vmem_limit_bytes=_vmem_limit_bytes()),
        cost_estimate=cost,
    )(x2d, w_hb, b_hb)


def pallas_attention(q_hm, k_hm, v_hm, *, num_heads, tq=256,
                     q_group_offset=0, k_group_offset=0, v_group_offset=0,
                     weights_dtype=jnp.bfloat16, ctx_dtype=jnp.bfloat16,
                     approx_recip=True):
    """Head-major scaled-dot-product attention (scale pre-folded into W_q).

    q_hm/k_hm/v_hm: (groups, B, S, dk); head h of each tensor lives at group
    index `*_group_offset + h` (so a fused QKV slab can be passed three times
    without ever being sliced by XLA).  Returns context (B, H, Sq, dk) and
    attention weights (B, H, Sq, Skv).
    """
    _, B, Sq, dk = q_hm.shape
    Skv = k_hm.shape[2]
    H = num_heads

    tq = _pick_tile(Sq, tq, 8)
    grid = (B, H, Sq // tq)

    in_item = jnp.dtype(q_hm.dtype).itemsize
    w_item = jnp.dtype(weights_dtype).itemsize
    c_item = jnp.dtype(ctx_dtype).itemsize
    _check_vmem("attention",
                2 * ((tq + 2 * Skv) * dk * in_item
                     + tq * Skv * w_item + tq * dk * c_item))

    cost = pl.CostEstimate(
        flops=4 * B * H * Sq * Skv * dk,
        transcendentals=B * H * Sq * Skv,
        bytes_accessed=(B * H * (Sq + 2 * Skv) * dk * in_item
                        + B * H * Sq * dk * c_item
                        + B * H * Sq * Skv * w_item))

    def q_index_map(off):
        def imap(b, h, i):
            return (off + h, b, i, 0)
        return imap

    def kv_index_map(off):
        def imap(b, h, i):
            return (off + h, b, 0, 0)          # resident across the query-tile axis
        return imap

    kernel = functools.partial(mha_attention_kernel, approx_recip=approx_recip)

    return pl.pallas_call(
        kernel,
        out_shape=(jax.ShapeDtypeStruct((B, H, Sq, dk), ctx_dtype),
                   jax.ShapeDtypeStruct((B, H, Sq, Skv), weights_dtype)),
        grid=grid,
        in_specs=[
            pl.BlockSpec((None, None, tq, dk), q_index_map(q_group_offset)),
            pl.BlockSpec((None, None, Skv, dk), kv_index_map(k_group_offset)),
            pl.BlockSpec((None, None, Skv, dk), kv_index_map(v_group_offset)),
        ],
        out_specs=(
            pl.BlockSpec((None, None, tq, dk), lambda b, h, i: (b, h, i, 0)),
            pl.BlockSpec((None, None, tq, Skv), lambda b, h, i: (b, h, i, 0)),
        ),
        compiler_params=pltpu.CompilerParams(
            # Nothing is a reduction: batch/head/query-tile are all independent,
            # so v7x's 2 TensorCores can shard any of them.
            dimension_semantics=("parallel", "parallel", "parallel"),
            vmem_limit_bytes=_vmem_limit_bytes()),
        cost_estimate=cost,
    )(q_hm, k_hm, v_hm)


def pallas_out_proj(ctx_hm, w_o, b_o, *, tm=256, tn=512,
                    compute_dtype=jnp.bfloat16, out_dtype=jnp.float32):
    """(B, H, S, dk) head-major context @ W_o + b_o -> (B, S, D) output.

    Per-head lanes are re-assembled inside the kernel (static concat), giving a
    lane-dense (tm, D) LHS without any HBM transpose of the context.
    """
    B, H, S, dk = ctx_hm.shape
    D = H * dk
    assert w_o.shape == (D, D)

    ctx_hm = ctx_hm.astype(compute_dtype)
    w_o = w_o.astype(compute_dtype)
    b_o = b_o.astype(jnp.float32)

    tm = _pick_tile(S, tm, 8)
    tn = _pick_tile(D, tn, 128)
    grid = (B, S // tm, D // tn)

    isz = jnp.dtype(compute_dtype).itemsize
    osz = jnp.dtype(out_dtype).itemsize
    _check_vmem("out_proj", 2 * (H * tm * dk + D * tn) * isz + 2 * tm * tn * osz)

    cost = pl.CostEstimate(
        flops=2 * B * S * D * D,
        transcendentals=0,
        bytes_accessed=B * S * D * isz + D * D * isz + B * S * D * osz)

    kernel = functools.partial(out_proj_kernel, num_heads=H)
    return pl.pallas_call(
        kernel,
        out_shape=jax.ShapeDtypeStruct((B, S, D), out_dtype),
        grid=grid,
        in_specs=[
            pl.BlockSpec((None, H, tm, dk), lambda b, i, j: (b, 0, i, 0)),
            pl.BlockSpec((D, tn), lambda b, i, j: (0, j)),
            pl.BlockSpec((1, tn), lambda b, i, j: (0, j)),
        ],
        out_specs=pl.BlockSpec((None, tm, tn), lambda b, i, j: (b, i, j)),
        compiler_params=pltpu.CompilerParams(
            dimension_semantics=("parallel", "parallel", "parallel"),
            vmem_limit_bytes=_vmem_limit_bytes()),
        cost_estimate=cost,
    )(ctx_hm, w_o, b_o)


# --------------------------- module-level forward --------------------------- #

def _head_blocked(w, b, num_heads, scale=None):
    """(K, D) weight / (1, D) bias -> per-head blocks (H, K, dk) / (H, 1, dk).
    Tiny one-time host prep (would be folded into weight loading in production)."""
    K, D = w.shape
    dk = D // num_heads
    if scale is not None:                      # fold 1/sqrt(dk) into W_q / b_q
        w = w * scale
        b = b * scale
    w_hb = w.reshape(K, num_heads, dk).transpose(1, 0, 2)
    b_hb = b.reshape(1, num_heads, dk).transpose(1, 0, 2)
    return w_hb, b_hb


def multi_head_attention(query, key, value, params, num_heads, *,
                         compute_dtype=jnp.bfloat16, weights_dtype=jnp.bfloat16):
    """Mirrors MultiHeadAttention.forward (mask=None, eval mode).

    query: (B, Sq, D); key/value: (B, Skv, D). Returns (output, attention_weights).
    """
    B, Sq, D = query.shape
    Skv = key.shape[1]
    H = num_heads
    dk = D // H
    scale = 1.0 / math.sqrt(dk)
    approx = jnp.dtype(compute_dtype) != jnp.dtype(jnp.float32)

    wq, bq = _head_blocked(params["wq"], params["bq"], H, scale=scale)
    wk, bk = _head_blocked(params["wk"], params["bk"], H)
    wv, bv = _head_blocked(params["wv"], params["bv"], H)

    if query is key and key is value:
        # Self-attention: one fused QKV projection; the head-major slab is
        # consumed by pallas_attention via index_map group offsets (no slices).
        w_qkv = jnp.concatenate([wq, wk, wv], axis=0)    # (3H, K, dk)
        b_qkv = jnp.concatenate([bq, bk, bv], axis=0)    # (3H, 1, dk)
        qkv = pallas_group_linear(query.reshape(B * Sq, D), w_qkv, b_qkv,
                                  compute_dtype=compute_dtype)
        qkv = qkv.reshape(3 * H, B, Sq, dk)              # free leading-dim reshape
        ctx, attn_w = pallas_attention(
            qkv, qkv, qkv, num_heads=H,
            q_group_offset=0, k_group_offset=H, v_group_offset=2 * H,
            weights_dtype=weights_dtype, ctx_dtype=compute_dtype,
            approx_recip=approx)
    else:
        q_hm = pallas_group_linear(query.reshape(B * Sq, D), wq, bq,
                                   compute_dtype=compute_dtype).reshape(H, B, Sq, dk)
        k_hm = pallas_group_linear(key.reshape(B * Skv, D), wk, bk,
                                   compute_dtype=compute_dtype).reshape(H, B, Skv, dk)
        v_hm = pallas_group_linear(value.reshape(B * Skv, D), wv, bv,
                                   compute_dtype=compute_dtype).reshape(H, B, Skv, dk)
        ctx, attn_w = pallas_attention(
            q_hm, k_hm, v_hm, num_heads=H,
            weights_dtype=weights_dtype, ctx_dtype=compute_dtype,
            approx_recip=approx)

    output = pallas_out_proj(ctx, params["wo"], params["bo"],
                             compute_dtype=compute_dtype, out_dtype=jnp.float32)
    return output, attn_w


def init_params(key, d_model):
    """Deterministic parameter init. Weights stored as (in, out); y = x @ W + b."""
    keys = jax.random.split(key, 8)
    bound = 1.0 / jnp.sqrt(jnp.float32(d_model))

    def lin(kw, kb):
        w = jax.random.uniform(kw, (d_model, d_model), jnp.float32, -bound, bound)
        b = jax.random.uniform(kb, (1, d_model), jnp.float32, -bound, bound)
        return w, b

    wq, bq = lin(keys[0], keys[1])
    wk, bk = lin(keys[2], keys[3])
    wv, bv = lin(keys[4], keys[5])
    wo, bo = lin(keys[6], keys[7])
    return dict(wq=wq, bq=bq, wk=wk, bk=bk, wv=wv, bv=bv, wo=wo, bo=bo)


# ----------------------------------- main ----------------------------------- #

if __name__ == "__main__":
    B, S, d_model, num_heads = 2, 8, 32, 4

    root = jax.random.PRNGKey(0)
    k_x, k_q, k_k, k_v, k_p = jax.random.split(root, 5)
    params = init_params(k_p, d_model)

    # pure-JAX reference (matches the PyTorch forward with mask=None, eval mode)
    def ref_forward(q, k, v, p):
        dk = d_model // num_heads
        Bq = q.shape[0]

        def proj(x, w, b):
            y = x.reshape(-1, d_model) @ w + b
            return y.reshape(Bq, -1, num_heads, dk).transpose(0, 2, 1, 3)

        Q = proj(q, p["wq"], p["bq"])
        K = proj(k, p["wk"], p["bk"])
        V = proj(v, p["wv"], p["bv"])
        s = jnp.einsum("bhqd,bhkd->bhqk", Q, K) / jnp.sqrt(jnp.float32(dk))
        w = jax.nn.softmax(s, axis=-1)
        c = jnp.einsum("bhqk,bhkd->bhqd", w, V)
        c = c.transpose(0, 2, 1, 3).reshape(-1, d_model)
        return (c @ p["wo"] + p["bo"]).reshape(Bq, -1, d_model), w

    x = jax.random.normal(k_x, (B, S, d_model), jnp.float32)
    query = jax.random.normal(k_q, (B, S, d_model), jnp.float32)
    key = jax.random.normal(k_k, (B, S, d_model), jnp.float32)
    value = jax.random.normal(k_v, (B, S, d_model), jnp.float32)

    # 1) self-attention (fused QKV path), exact f32 config -- tight tolerances.
    out, attn = multi_head_attention(x, x, x, params, num_heads,
                                     compute_dtype=jnp.float32,
                                     weights_dtype=jnp.float32)
    jax.block_until_ready((out, attn))
    ref_out, ref_attn = ref_forward(x, x, x, params)
    assert jnp.allclose(out, ref_out, atol=1e-4, rtol=1e-4)
    assert jnp.allclose(attn, ref_attn, atol=1e-5, rtol=1e-5)

    # 2) cross-attention (distinct q/k/v projections), exact f32 config.
    out, attn = multi_head_attention(query, key, value, params, num_heads,
                                     compute_dtype=jnp.float32,
                                     weights_dtype=jnp.float32)
    jax.block_until_ready((out, attn))
    ref_out, ref_attn = ref_forward(query, key, value, params)
    assert jnp.allclose(out, ref_out, atol=1e-4, rtol=1e-4)
    assert jnp.allclose(attn, ref_attn, atol=1e-5, rtol=1e-5)

    # 3) default production config: bf16 MXU operands + bf16 weights output
    #    (softmax math stays f32) -- relaxed tolerances.
    out_bf, attn_bf = multi_head_attention(x, x, x, params, num_heads)
    jax.block_until_ready((out_bf, attn_bf))
    ref_out, ref_attn = ref_forward(x, x, x, params)
    assert jnp.allclose(out_bf, ref_out, atol=2e-2, rtol=2e-2)
    assert jnp.allclose(attn_bf.astype(jnp.float32), ref_attn, atol=2e-2, rtol=2e-2)

    print("KERNEL_OK")
</pallas_src>

<mosaic_0001>
module attributes {stable_mosaic.version = 11 : i64} {
  func.func @group_linear_kernel(%arg0: i32, %arg1: i32, %arg2: i32, %arg3: memref<16x32xf32, #tpu.memory_space<vmem>>, %arg4: memref<1x32x8xf32, #tpu.memory_space<vmem>>, %arg5: memref<1x1x8xf32, #tpu.memory_space<vmem>>, %arg6: memref<1x16x8xf32, #tpu.memory_space<vmem>>, %arg7: memref<16x8xf32, #tpu.memory_space<vmem>>) attributes {dimension_semantics = [#tpu.dimension_semantics<parallel>, #tpu.dimension_semantics<parallel>, #tpu.dimension_semantics<arbitrary>], iteration_bounds = array<i64: 1, 12, 1>, scalar_prefetch = 0 : i64, scratch_operands = 1 : i64, tpu.core_type = #tpu.core_type<tc>, window_params = [{transform_indices = @transform_0, window_bounds = array<i64: 16, 32>}, {transform_indices = @transform_1, window_bounds = array<i64: 1, 32, 8>}, {transform_indices = @transform_2, window_bounds = array<i64: 1, 1, 8>}, {transform_indices = @transform_3, window_bounds = array<i64: 1, 16, 8>}]} {
    %c0_i32 = arith.constant 0 : i32
    %0 = arith.cmpi eq, %arg2, %c0_i32 : i32
    %1 = arith.extui %0 : i1 to i32
    %c0_i32_0 = arith.constant 0 : i32
    %2 = arith.cmpi ne, %1, %c0_i32_0 : i32
    scf.if %2 {
      %cst_11 = arith.constant 0.000000e+00 : f32
      %13 = vector.broadcast %cst_11 : f32 to vector<16x8xf32>
      %c0_12 = arith.constant 0 : index
      %c0_13 = arith.constant 0 : index
      %14 = vector.load %arg7[%c0_12, %c0_13] : memref<16x8xf32, #tpu.memory_space<vmem>>, vector<16x8xf32>
      tpu.vector_store %arg7[%c0_12, %c0_13], %13 {strides = array<i32>} : memref<16x8xf32, #tpu.memory_space<vmem>>, vector<16x8xf32>,
    } else {
    }
    %c0 = arith.constant 0 : index
    %c0_1 = arith.constant 0 : index
    %3 = vector.load %arg7[%c0, %c0_1] : memref<16x8xf32, #tpu.memory_space<vmem>>, vector<16x8xf32>
    %c0_2 = arith.constant 0 : index
    %c0_3 = arith.constant 0 : index
    %4 = vector.load %arg3[%c0_2, %c0_3] : memref<16x32xf32, #tpu.memory_space<vmem>>, vector<16x32xf32>
    %c0_4 = arith.constant 0 : index
    %c0_5 = arith.constant 0 : index
    %c0_6 = arith.constant 0 : index
    %5 = vector.load %arg4[%c0_4, %c0_5, %c0_6] : memref<1x32x8xf32, #tpu.memory_space<vmem>>, vector<1x32x8xf32>
    %6 = vector.shape_cast %5 : vector<1x32x8xf32> to vector<32x8xf32>
    %cst = arith.constant dense<0.000000e+00> : vector<16x8xf32>
    %7 = tpu.matmul %4, %6, %cst {dimension_numbers = #tpu.dot_dimension_numbers<[1], [0], [0], [1], [0, 0, 1, 1], [], []>} : vector<16x32xf32>, vector<32x8xf32>, vector<16x8xf32> -> vector<16x8xf32>
    %8 = arith.addf %3, %7 : vector<16x8xf32>
    %c0_7 = arith.constant 0 : index
    %c0_8 = arith.constant 0 : index
    %9 = vector.load %arg7[%c0_7, %c0_8] : memref<16x8xf32, #tpu.memory_space<vmem>>, vector<16x8xf32>
    tpu.vector_store %arg7[%c0_7, %c0_8], %8 {strides = array<i32>} : memref<16x8xf32, #tpu.memory_space<vmem>>, vector<16x8xf32>,
    %c0_i32_9 = arith.constant 0 : i32
    %10 = arith.cmpi eq, %arg2, %c0_i32_9 : i32
    %11 = arith.extui %10 : i1 to i32
    %c0_i32_10 = arith.constant 0 : i32
    %12 = arith.cmpi ne, %11, %c0_i32_10 : i32
    scf.if %12 {
      %c0_11 = arith.constant 0 : index
      %c0_12 = arith.constant 0 : index
      %13 = vector.load %arg7[%c0_11, %c0_12] : memref<16x8xf32, #tpu.memory_space<vmem>>, vector<16x8xf32>
      %c0_13 = arith.constant 0 : index
      %c0_14 = arith.constant 0 : index
      %c0_15 = arith.constant 0 : index
      %14 = vector.load %arg5[%c0_13, %c0_14, %c0_15] : memref<1x1x8xf32, #tpu.memory_space<vmem>>, vector<1x1x8xf32>
      %15 = vector.shape_cast %14 : vector<1x1x8xf32> to vector<1x8xf32>
      %16 = vector.broadcast %15 : vector<1x8xf32> to vector<16x8xf32>
      %17 = arith.addf %13, %16 : vector<16x8xf32>
      %c0_16 = arith.constant 0 : index
      %c0_17 = arith.constant 0 : index
      %c0_18 = arith.constant 0 : index
      %18 = vector.load %arg6[%c0_16, %c0_17, %c0_18] : memref<1x16x8xf32, #tpu.memory_space<vmem>>, vector<1x16x8xf32>
      %19 = vector.shape_cast %18 : vector<1x16x8xf32> to vector<16x8xf32>
      %20 = vector.shape_cast %17 : vector<16x8xf32> to vector<1x16x8xf32>
      tpu.vector_store %arg6[%c0_16, %c0_17, %c0_18], %20 {strides = array<i32>} : memref<1x16x8xf32, #tpu.memory_space<vmem>>, vector<1x16x8xf32>,
    } else {
    }
    return
  }
  func.func @transform_0(%arg0: i32, %arg1: i32, %arg2: i32) -> (i32, i32) {
    %c0_i32 = arith.constant 0 : i32
    return %arg0, %arg2 : i32, i32
  }
  func.func @transform_1(%arg0: i32, %arg1: i32, %arg2: i32) -> (i32, i32, i32) {
    %c0_i32 = arith.constant 0 : i32
    %c0_i32_0 = arith.constant 0 : i32
    return %arg1, %arg2, %c0_i32 : i32, i32, i32
  }
  func.func @transform_2(%arg0: i32, %arg1: i32, %arg2: i32) -> (i32, i32, i32) {
    %c0_i32 = arith.constant 0 : i32
    %c0_i32_0 = arith.constant 0 : i32
    %c0_i32_1 = arith.constant 0 : i32
    return %arg1, %c0_i32, %c0_i32_0 : i32, i32, i32
  }
  func.func @transform_3(%arg0: i32, %arg1: i32, %arg2: i32) -> (i32, i32, i32) {
    %c0_i32 = arith.constant 0 : i32
    %c0_i32_0 = arith.constant 0 : i32
    return %arg1, %arg0, %c0_i32 : i32, i32, i32
  }
}

</mosaic_0001>

<llo_original>
// kernel: tpu_custom_call.1
$region0: #{tpu_custom_call.1}
  #allocation0 [shape = 'u32[]', space=smem, size = 0x4, offset = 0x4, fixed_abs, tag = 'smem constant byte address 0x4 - core index']
  #allocation1 [shape = 'u32[144,128]{1,0:T(1,128)}', space=vmem, size = 0x12000, scoped, tag = 'internal scratch']
  #allocation2 [shape = 'f32[16,8]{1,0:T(8,128)}', space=vmem, size = 0x2000, scoped, tag = 'scratch operand']
  %s0 = inlined_call_operand.vmem [shape: f32[16,32], index: 0, kind: input, shape index: {}]
  %s1 = inlined_call_operand.vmem [shape: f32[12,32,8], index: 1, kind: input, shape index: {}]
  %s2 = inlined_call_operand.vmem [shape: f32[12,1,8], index: 2, kind: input, shape index: {}]
  %s3 = inlined_call_operand.vmem [shape: f32[12,16,8], index: 3, kind: output, shape index: {}]
  %s4 = sld [smem:[#allocation0]]
  $region53: #{tpu_custom_call.1} parent=0
    _
  %s6 = ssub.s32 1, %s4
  %s7 = scalar_select 0, %s6, %s4
  loop: start=0, step=1, limit=14
  $region2: #{tpu_custom_call.1} parent=0 // loop_pre_header
    _
  $region3: #{tpu_custom_call.1} parent=0 // loop_header
    %s9 = sphi 0, %s13
    %p10 = scmp.ge.s32.totalorder %s9, 14
    %s16 = sphi 0, %s35
    %s17 = sphi 0, %s31
    %s18 = sphi 0, %s27
    %s19 = sphi 0, %s16
    %s20 = sphi 0, %s17
    %s21 = sphi 0, %s18
    %s22 = sphi 0, %s19
    %s23 = sphi 0, %s20
    %s24 = sphi 0, %s21
    %s40 = sphi 0, %s42
    %s43 = sphi 0, %s40
    %s44 = sphi 0, %s43
    %s60 = sphi 0, %s44
    %s68 = sphi 0, %s70
    %s71 = sphi 0, %s68
    %s72 = sphi 0, %s71
    %s88 = sphi 0, %s72
    %s94 = sphi 0, %s96
    %s97 = sphi 0, %s94
    %s98 = sphi 0, %s97
    %s114 = sphi 0, %s98
    %s122 = sphi 0, %s124
    %s125 = sphi 0, %s122
    %s126 = sphi 0, %s125
    %s142 = sphi 0, %s126
  $region4: #{tpu_custom_call.1} parent=0 // loop_header_branch
    %12 = sbr.rel (%p10) target = $region8
  $region5: #{tpu_custom_call.1} parent=0 // loop_body
    %s14 = ssub.s32 %s9, 1
    %s15 = ssub.s32 %s9, 2
    %s25 = sadd.s32 1, %s18
    %p26 = scmp.ge.s32.totalorder %s25, 1
    %s27 = scalar_select %p26, 0, %s25
    %s28 = sadd.s32 1, %s17
    %s29 = scalar_select %p26, %s28, %s17
    %p30 = scmp.ge.s32.totalorder %s29, 12
    %s31 = scalar_select %p30, 0, %s29
    %s32 = sadd.s32 1, %s16
    %s33 = scalar_select %p30, %s32, %s16
    %p34 = scmp.ge.s32.totalorder %s33, 1
    %s35 = scalar_select %p34, 0, %s33
    %s36 = ssub.s32 %s16, %s35
    %s37 = ssub.s32 %s18, %s27
    %s38 = sor.u32 %s36, %s37
    %p39 = scmp.eq.s32.totalorder %s38, 0
    %s41 = sadd.s32 %s40, 1
    %s42 = scalar_select %p39, %s40, %s41
    %p45 = pneg %p39
    %p46 = scmp.eq.s32.totalorder %s9, 11
    %p47 = por %p45, %p46
    %p48 = scmp.ne.s32.totalorder %s40, %s43
    %p49 = scmp.eq.s32.totalorder %s9, 0
    %p50 = por %p48, %p49
    %p51 = scmp.ne.s32.totalorder %s40, %s43
    %p52 = scmp.eq.s32.totalorder %s14, 11
    %p53 = por %p51, %p52
    %p54 = scmp.ne.s32.totalorder %s43, %s44
    %p55 = scmp.eq.s32.totalorder %s14, 0
    %p56 = por %p54, %p55
    %p57 = scmp.ne.s32.totalorder %s43, %s44
    %p58 = scmp.eq.s32.totalorder %s15, 11
    %p59 = por %p57, %p58
    %p61 = scmp.ne.s32.totalorder %s44, %s60
    %p62 = scmp.eq.s32.totalorder %s15, 0
    %p63 = por %p61, %p62
    %s64 = ssub.s32 %s17, %s31
    %s65 = ssub.s32 %s18, %s27
    %s66 = sor.u32 %s64, %s65
    %p67 = scmp.eq.s32.totalorder %s66, 0
    %s69 = sadd.s32 %s68, 1
    %s70 = scalar_select %p67, %s68, %s69
    %p73 = pneg %p67
    %p74 = scmp.eq.s32.totalorder %s9, 11
    %p75 = por %p73, %p74
    %p76 = scmp.ne.s32.totalorder %s68, %s71
    %p77 = scmp.eq.s32.totalorder %s9, 0
    %p78 = por %p76, %p77
    %p79 = scmp.ne.s32.totalorder %s68, %s71
    %p80 = scmp.eq.s32.totalorder %s14, 11
    %p81 = por %p79, %p80
    %p82 = scmp.ne.s32.totalorder %s71, %s72
    %p83 = scmp.eq.s32.totalorder %s14, 0
    %p84 = por %p82, %p83
    %p85 = scmp.ne.s32.totalorder %s71, %s72
    %p86 = scmp.eq.s32.totalorder %s15, 11
    %p87 = por %p85, %p86
    %p89 = scmp.ne.s32.totalorder %s72, %s88
    %p90 = scmp.eq.s32.totalorder %s15, 0
    %p91 = por %p89, %p90
    %s92 = ssub.s32 %s17, %s31
    %p93 = scmp.eq.s32.totalorder %s92, 0
    %s95 = sadd.s32 %s94, 1
    %s96 = scalar_select %p93, %s94, %s95
    %p99 = pneg %p93
    %p100 = scmp.eq.s32.totalorder %s9, 11
    %p101 = por %p99, %p100
    %p102 = scmp.ne.s32.totalorder %s94, %s97
    %p103 = scmp.eq.s32.totalorder %s9, 0
    %p104 = por %p102, %p103
    %p105 = scmp.ne.s32.totalorder %s94, %s97
    %p106 = scmp.eq.s32.totalorder %s14, 11
    %p107 = por %p105, %p106
    %p108 = scmp.ne.s32.totalorder %s97, %s98
    %p109 = scmp.eq.s32.totalorder %s14, 0
    %p110 = por %p108, %p109
    %p111 = scmp.ne.s32.totalorder %s97, %s98
    %p112 = scmp.eq.s32.totalorder %s15, 11
    %p113 = por %p111, %p112
    %p115 = scmp.ne.s32.totalorder %s98, %s114
    %p116 = scmp.eq.s32.totalorder %s15, 0
    %p117 = por %p115, %p116
    %s118 = ssub.s32 %s17, %s31
    %s119 = ssub.s32 %s16, %s35
    %s120 = sor.u32 %s118, %s119
    %p121 = scmp.eq.s32.totalorder %s120, 0
    %s123 = sadd.s32 %s122, 1
    %s124 = scalar_select %p121, %s122, %s123
    %p127 = pneg %p121
    %p128 = scmp.eq.s32.totalorder %s9, 11
    %p129 = por %p127, %p128
    %p130 = scmp.ne.s32.totalorder %s122, %s125
    %p131 = scmp.eq.s32.totalorder %s9, 0
    %p132 = por %p130, %p131
    %p133 = scmp.ne.s32.totalorder %s122, %s125
    %p134 = scmp.eq.s32.totalorder %s14, 11
    %p135 = por %p133, %p134
    %p136 = scmp.ne.s32.totalorder %s125, %s126
    %p137 = scmp.eq.s32.totalorder %s14, 0
    %p138 = por %p136, %p137
    %p139 = scmp.ne.s32.totalorder %s125, %s126
    %p140 = scmp.eq.s32.totalorder %s15, 11
    %p141 = por %p139, %p140
    %p143 = scmp.ne.s32.totalorder %s126, %s142
    %p144 = scmp.eq.s32.totalorder %s15, 0
    %p145 = por %p143, %p144
    %p146 = scmp.le.s32.totalorder 1, %s9
    %p147 = scmp.lt.s32.totalorder %s9, 13
    %p148 = pnand %p146, %p147
    %p149 = pneg %p148
    // Predicated region
    $region9: #{tpu_custom_call.1} parent=5 // pred_check
      _
    $region10: #{tpu_custom_call.1} parent=5 // pred_check_branch
      %151 = sbr.rel (%p148) target = $region12
    $region11: #{tpu_custom_call.1} parent=5 // pred_region
      %s152 = ssub.s32 %s9, 1
      // Predicated region
      $region13: #{tpu_custom_call.1} parent=11 // pred_check
        %p153 = pneg %p56
      $region14: #{tpu_custom_call.1} parent=11 // pred_check_branch
        %155 = sbr.rel (%p153) target = $region16
      $region15: #{tpu_custom_call.1} parent=11 // pred_region
        %s156 = smul.u32 2, %s19
        %p157 = scmp.lt.s32.totalorder %s156, 1
        %s158 = scalar_select %p157, %s156, 1
        %p159 = scmp.lt.s32.totalorder %s21, 0
        %s160 = scalar_select %p159, %s21, 0
        %s161 = sadd.s32 %s160, %s158
        %s162 = smul.addr %s161, 8
        %s163 = scalar_lea.vmem %s0, %s162
        %s164 = smul.u32 2, %s19
      $region16: #{tpu_custom_call.1} parent=11 // pred_fallthru
        _
    $region12: #{tpu_custom_call.1} parent=5 // pred_fallthru
      _
    %p165 = scmp.lt.s32.totalorder %s9, 12
    // Predicated region
    $region17: #{tpu_custom_call.1} parent=5 // pred_check
      %p166 = pneg %p165
    $region18: #{tpu_custom_call.1} parent=5 // pred_check_branch
      %168 = sbr.rel (%p166) target = $region20
    $region19: #{tpu_custom_call.1} parent=5 // pred_region
      // Predicated region
      $region21: #{tpu_custom_call.1} parent=19 // pred_check
        %p169 = pneg %p78
      $region22: #{tpu_custom_call.1} parent=19 // pred_check_branch
        %171 = sbr.rel (%p169) target = $region24
      $region23: #{tpu_custom_call.1} parent=19 // pred_region
        %s172 = smul.u32 4, %s18
        %p173 = scmp.lt.s32.totalorder %s17, 11
        %s174 = scalar_select %p173, %s17, 11
        %p175 = scmp.lt.s32.totalorder %s172, 3
        %s176 = scalar_select %p175, %s172, 3
        %s177 = smul.addr %s174, 4
        %s178 = sadd.s32 %s176, %s177
        %s179 = smul.addr %s178, 8
        %s180 = scalar_lea.vmem %s1, %s179
        %s181 = smul.u32 4, %s18
      $region24: #{tpu_custom_call.1} parent=19 // pred_fallthru
        _
      // Predicated region
      $region25: #{tpu_custom_call.1} parent=19 // pred_check
        %p182 = pneg %p104
      $region26: #{tpu_custom_call.1} parent=19 // pred_check_branch
        %184 = sbr.rel (%p182) target = $region28
      $region27: #{tpu_custom_call.1} parent=19 // pred_region
        %p185 = scmp.lt.s32.totalorder %s17, 11
        %s186 = scalar_select %p185, %s17, 11
        %s187 = scalar_lea.vmem %s2, %s186
      $region28: #{tpu_custom_call.1} parent=19 // pred_fallthru
        _
    $region20: #{tpu_custom_call.1} parent=5 // pred_fallthru
      _
    %p188 = scmp.le.s32.totalorder 1, %s9
    %p189 = scmp.lt.s32.totalorder %s9, 13
    %p190 = pnand %p188, %p189
    %p191 = pneg %p190
    // Predicated region
    $region29: #{tpu_custom_call.1} parent=5 // pred_check
      _
    $region30: #{tpu_custom_call.1} parent=5 // pred_check_branch
      %193 = sbr.rel (%p190) target = $region32
    $region31: #{tpu_custom_call.1} parent=5 // pred_region
      %s194 = ssub.s32 %s9, 1
      %s195 = smul.u32 2, %s19
      %p196 = scmp.lt.s32.totalorder %s195, 1
      %s197 = scalar_select %p196, %s195, 1
      %p198 = scmp.lt.s32.totalorder %s21, 0
      %s199 = scalar_select %p198, %s21, 0
      %s200 = sadd.s32 %s199, %s197
      %s201 = smul.addr %s200, 8
      %s202 = scalar_lea.vmem %s0, %s201
      %p203 = pneg %p56
      %p204 = pneg %p53
      %s205 = smul.u32 4, %s21
      %p206 = scmp.lt.s32.totalorder %s20, 11
      %s207 = scalar_select %p206, %s20, 11
      %p208 = scmp.lt.s32.totalorder %s205, 3
      %s209 = scalar_select %p208, %s205, 3
      %s210 = smul.addr %s207, 4
      %s211 = sadd.s32 %s209, %s210
      %s212 = smul.addr %s211, 8
      %s213 = scalar_lea.vmem %s1, %s212
      %p214 = pneg %p84
      %p215 = pneg %p81
      %p216 = scmp.lt.s32.totalorder %s20, 11
      %s217 = scalar_select %p216, %s20, 11
      %s218 = scalar_lea.vmem %s2, %s217
      %p219 = pneg %p110
      %p220 = pneg %p107
      %p221 = pneg %p138
      %p222 = pneg %p135
      %s223 = smul.u32 2, %s19
      %p224 = scmp.lt.s32.totalorder %s20, 11
      %s225 = scalar_select %p224, %s20, 11
      %p226 = scmp.lt.s32.totalorder %s223, 1
      %s227 = scalar_select %p226, %s223, 1
      %s228 = smul.addr %s225, 2
      %s229 = sadd.s32 %s227, %s228
      %s230 = smul.addr %s229, 8
      %s231 = scalar_lea.vmem %s3, %s230
      %s232 = smul.u32 2, %s19
      %p233 = scmp.lt.s32.totalorder %s232, 1
      %s234 = scalar_select %p233, %s232, 1
      %p235 = scmp.lt.s32.totalorder %s21, 0
      %s236 = scalar_select %p235, %s21, 0
      %s237 = sadd.s32 %s236, %s234
      %s238 = smul.addr %s237, 8
      %s239 = scalar_lea.vmem %s0, %s238
      %s240 = smul.u32 2, %s19
      %s241 = smul.u32 4, %s21
      %p242 = scmp.lt.s32.totalorder %s20, 11
      %s243 = scalar_select %p242, %s20, 11
      %p244 = scmp.lt.s32.totalorder %s241, 3
      %s245 = scalar_select %p244, %s241, 3
      %s246 = smul.addr %s243, 4
      %s247 = sadd.s32 %s245, %s246
      %s248 = smul.addr %s247, 8
      %s249 = scalar_lea.vmem %s1, %s248
      %s250 = smul.u32 4, %s21
      %p251 = scmp.lt.s32.totalorder %s20, 11
      %s252 = scalar_select %p251, %s20, 11
      %s253 = scalar_lea.vmem %s2, %s252
      %s254 = smul.u32 2, %s19
      %p255 = scmp.lt.s32.totalorder %s20, 11
      %s256 = scalar_select %p255, %s20, 11
      %p257 = scmp.lt.s32.totalorder %s254, 1
      %s258 = scalar_select %p257, %s254, 1
      %s259 = smul.addr %s256, 2
      %s260 = sadd.s32 %s258, %s259
      %s261 = smul.addr %s260, 8
      %s262 = scalar_lea.vmem %s3, %s261
      %s263 = smul.u32 2, %s19
      %p264 = scmp.eq.s32.totalorder %s21, 0
      // Predicated region
      $region33: #{tpu_custom_call.1} parent=31 // pred_check
        %p265 = pneg %p264
      $region34: #{tpu_custom_call.1} parent=31 // pred_check_branch
        %267 = sbr.rel (%p265) target = $region36
      $region35: #{tpu_custom_call.1} parent=31 // pred_region
        %vm268 = vcmask 64512
        %269 = vst.msk [vmem:[#allocation2] sm:$0xff] %vm268, 0.0
        %270 = vst.msk [vmem:[#allocation2 + $0x8] sm:$0xff] %vm268, 0.0
      $region36: #{tpu_custom_call.1} parent=31 // pred_fallthru
        _
      %v271 = vld [vmem:[#allocation2] sm:$0xff]
      %v272 = vld [vmem:[#allocation2 + $0x8] sm:$0xff]
      %v273 = vld [vmem:[%s239] sm:$0xff]
      %v274 = vld [vmem:[%s239 + $0x8] sm:$0xff]
      %v275 = vld [vmem:[%s249] sm:$0xff]
      %v276 = vld [vmem:[%s249 + $0x8] sm:$0xff]
      %v277 = vld [vmem:[%s249 + $0x10] sm:$0xff]
      %v278 = vld [vmem:[%s249 + $0x18] sm:$0xff]
      %vm279 = vcmask 261120
      %v281 = vsel %vm279, %v273, 0
      %v284 = vsel %vm279, %v274, 0
      %286 = vmatprep.subr.mxu0 0.0
      %287 = vmatpush1.msra.mxu0 %v275
      %288 = vmatprep.subr.mxu0 0.0
      %289 = vmatpush1.msra.mxu0 %v276
      %290 = vmatprep.subr.mxu0 0.0
      %291 = vmatpush1.msra.mxu0 %v277
      %292 = vmatprep.subr.mxu0 0.0
      %293 = vmatpush1.msra.mxu0 %v278
      %294 = vmatprep.subr.mxu0 0.0
      %295 = vmatpush1.msra.mxu0 0.0
      %296 = vmatprep.subr.mxu0 0.0
      %297 = vmatpush1.msra.mxu0 0.0
      %298 = vmatprep.subr.mxu0 0.0
      %299 = vmatpush1.msra.mxu0 0.0
      %300 = vmatprep.subr.mxu0 0.0
      %301 = vmatpush1.msra.mxu0 0.0
      %302 = vmatprep.subr.mxu0 0.0
      %303 = vmatpush1.msra.mxu0 0.0
      %304 = vmatprep.subr.mxu0 0.0
      %305 = vmatpush1.msra.mxu0 0.0
      %306 = vmatprep.subr.mxu0 0.0
      %307 = vmatpush1.msra.mxu0 0.0
      %308 = vmatprep.subr.mxu0 0.0
      %309 = vmatpush1.msra.mxu0 0.0
      %310 = vmatprep.subr.mxu0 0.0
      %311 = vmatpush1.msra.mxu0 0.0
      %312 = vmatprep.subr.mxu0 0.0
      %313 = vmatpush1.msra.mxu0 0.0
      %314 = vmatprep.subr.mxu0 0.0
      %315 = vmatpush1.msra.mxu0 0.0
      %316 = vmatprep.subr.mxu0 0.0
      %317 = vmatpush1.msra.mxu0 0.0
      %318 = vmatprep.subr.mxu0 0.0
      %319 = vmatpush1.msra.mxu0 0.0
      %320 = vmatprep.subr.mxu0 0.0
      %321 = vmatpush1.msra.mxu0 0.0
      %322 = vmatprep.subr.mxu0 0.0
      %323 = vmatpush1.msra.mxu0 0.0
      %324 = vmatprep.subr.mxu0 0.0
      %325 = vmatpush1.msra.mxu0 0.0
      %326 = vmatprep.subr.mxu0 0.0
      %327 = vmatpush1.msra.mxu0 0.0
      %328 = vmatprep.subr.mxu0 0.0
      %329 = vmatpush1.msra.mxu0 0.0
      %330 = vmatprep.subr.mxu0 0.0
      %331 = vmatpush1.msra.mxu0 0.0
      %332 = vmatprep.subr.mxu0 0.0
      %333 = vmatpush1.msra.mxu0 0.0
      %334 = vmatprep.subr.mxu0 0.0
      %335 = vmatpush1.msra.mxu0 0.0
      %336 = vmatprep.subr.mxu0 0.0
      %337 = vmatpush1.msra.mxu0 0.0
      %338 = vmatprep.subr.mxu0 0.0
      %339 = vmatpush1.msra.mxu0 0.0
      %340 = vmatprep.subr.mxu0 0.0
      %341 = vmatpush1.msra.mxu0 0.0
      %342 = vmatprep.subr.mxu0 0.0
      %343 = vmatpush1.msra.mxu0 0.0
      %344 = vmatprep.subr.mxu0 0.0
      %345 = vmatpush1.msra.mxu0 0.0
      %346 = vmatprep.subr.mxu0 0.0
      %347 = vmatpush1.msra.mxu0 0.0
      %348 = vmatprep.subr.mxu0 0.0
      %349 = vmatpush1.msra.mxu0 0.0
      %350 = vmatprep.mubr.f32.mxu0 0.0
      %351 = vmatmul.mubr.f32.gmra.mrb[0].mxu0 %v281
      %v352 = vpop.f32.mrb[0].mxu0
      %v353 = vadd.f32 0.0, %v352
      %v354 = vpop.f32.mrb[0].mxu0
      %355 = vmatprep.mubr.f32.mxu0 0.0
      %356 = vmatmul.mubr.f32.gmra.mrb[0].mxu0 %v284
      %v357 = vpop.f32.mrb[0].mxu0
      %v358 = vadd.f32 0.0, %v357
      %v359 = vpop.f32.mrb[0].mxu0
      %360 = vdwg.mxu0
      %v361 = vadd.f32 %v271, %v353
      %v362 = vadd.f32 %v272, %v358
      %vm363 = vcmask 64512
      %364 = vst.msk [vmem:[#allocation2] sm:$0xff] %vm363, %v361
      %365 = vst.msk [vmem:[#allocation2 + $0x8] sm:$0xff] %vm363, %v362
      // Predicated region
      $region37: #{tpu_custom_call.1} parent=31 // pred_check
        %p366 = pneg %p264
      $region38: #{tpu_custom_call.1} parent=31 // pred_check_branch
        %368 = sbr.rel (%p366) target = $region40
      $region39: #{tpu_custom_call.1} parent=31 // pred_region
        %v369 = vld [vmem:[#allocation2] sm:$0xff]
        %v370 = vld [vmem:[#allocation2 + $0x8] sm:$0xff]
        %v371 = vld [vmem:[%s253] sm:$0x1]
        %v373 = vlaneseq
        %v374 = vshrl.u32 %v373, 7
        %v375 = vsub.s32 0, %v374
        %v376 = vrot.slane %v371, %v375
        %v378 = vadd.f32 %v369, %v376
        %v379 = vadd.f32 %v370, %v376
        %380 = vst.msk [vmem:[%s262] sm:$0xff] %vm363, %v378
        %381 = vst.msk [vmem:[%s262 + $0x8] sm:$0xff] %vm363, %v379
      $region40: #{tpu_custom_call.1} parent=31 // pred_fallthru
        _
      %s382 = smul.u32 2, %s19
      %p383 = scmp.lt.s32.totalorder %s20, 11
      %s384 = scalar_select %p383, %s20, 11
      %p385 = scmp.lt.s32.totalorder %s382, 1
      %s386 = scalar_select %p385, %s382, 1
      %s387 = smul.addr %s384, 2
      %s388 = sadd.s32 %s386, %s387
      %s389 = smul.addr %s388, 8
      %s390 = scalar_lea.vmem %s3, %s389
      // Predicated region
      $region41: #{tpu_custom_call.1} parent=31 // pred_check
        %p391 = pneg %p135
      $region42: #{tpu_custom_call.1} parent=31 // pred_check_branch
        %393 = sbr.rel (%p391) target = $region44
      $region43: #{tpu_custom_call.1} parent=31 // pred_region
        %s394 = smul.u32 2, %s19
      $region44: #{tpu_custom_call.1} parent=31 // pred_fallthru
        _
    $region32: #{tpu_custom_call.1} parent=5 // pred_fallthru
      _
    %p395 = scmp.le.s32.totalorder 2, %s9
    // Predicated region
    $region45: #{tpu_custom_call.1} parent=5 // pred_check
      %p396 = pneg %p395
    $region46: #{tpu_custom_call.1} parent=5 // pred_check_branch
      %398 = sbr.rel (%p396) target = $region48
    $region47: #{tpu_custom_call.1} parent=5 // pred_region
      %s399 = ssub.s32 %s9, 2
      // Predicated region
      $region49: #{tpu_custom_call.1} parent=47 // pred_check
        %p400 = pneg %p141
      $region50: #{tpu_custom_call.1} parent=47 // pred_check_branch
        %402 = sbr.rel (%p400) target = $region52
      $region51: #{tpu_custom_call.1} parent=47 // pred_region
        %s403 = smul.u32 2, %s22
        %p404 = scmp.lt.s32.totalorder %s23, 11
        %s405 = scalar_select %p404, %s23, 11
        %p406 = scmp.lt.s32.totalorder %s403, 1
        %s407 = scalar_select %p406, %s403, 1
        %s408 = smul.addr %s405, 2
        %s409 = sadd.s32 %s407, %s408
        %s410 = smul.addr %s409, 8
        %s411 = scalar_lea.vmem %s3, %s410
      $region52: #{tpu_custom_call.1} parent=47 // pred_fallthru
        _
    $region48: #{tpu_custom_call.1} parent=5 // pred_fallthru
      _
  $region6: #{tpu_custom_call.1} parent=0 // loop_footer
    %s13 = sadd.s32 1, %s9
  $region7: #{tpu_custom_call.1} parent=0 // loop_footer_branch
    %8 = sbr.rel target = $region3
  $region8: #{tpu_custom_call.1} parent=0 // loop_exit
    _

</llo_original>
